<compile_context>
chip_gen: v5e
topology: v5e:2x2
jax: 0.10.0
libtpu: 0.0.40
codegen_flags: <defaults>
</compile_context>

<pallas_src>
import functools
import math

import jax
import jax.numpy as jnp
from jax.experimental import pallas as pl
from jax.experimental.pallas import tpu as pltpu


def _swap_kernel(x_ref, o_ref, *, ca, cb):
    # In-VMEM relayout of the tile; hidden under the HBM DMA (kernel is
    # memory-bound), XLU/copy slots are free relative to HBM bandwidth.
    o_ref[...] = jnp.swapaxes(x_ref[...], ca, cb)


def _largest_aligned_divisor(dim, limit, align):
    """Largest d with d | dim, d % align == 0, d <= limit (0 if none)."""
    best = 0
    i = 1
    while i * i <= dim:
        if dim % i == 0:
            for d in (i, dim // i):
                if d <= limit and d % align == 0 and d > best:
                    best = d
        i += 1
    return best


def _shrink_once(dim, ext, align):
    """One shrink step: largest aligned extent <= ext//2, preferring divisors
    of `dim` (no ragged last block).  Returns ext unchanged if at the floor."""
    if ext <= align:
        return ext
    target = max(align, ext // 2)
    d = _largest_aligned_divisor(dim, target, align)
    if d >= align:
        return d
    return (target // align) * align


def _fit_block(dims, exts, aligns, itemsize, budget_bytes):
    """Shrink block extents until the block fits in budget_bytes.
    Shrink batch axes (align 1) first, sublane-aligned axes next, lane axes
    last; within a class shrink the largest extent first."""
    ext = list(exts)

    def nbytes():
        return itemsize * math.prod(ext)

    while nbytes() > budget_bytes:
        cand = [k for k in range(len(ext))
                if _shrink_once(dims[k], ext[k], aligns[k]) < ext[k]]
        if not cand:
            break
        k = min(cand, key=lambda i: (aligns[i], -ext[i]))
        ext[k] = _shrink_once(dims[k], ext[k], aligns[k])
    return ext


def transpose_pallas(x: jax.Array, dim0: int, dim1: int,
                     *, block_bytes: int = 4 * 1024 * 1024) -> jax.Array:
    """torch.transpose(x, dim0, dim1).contiguous() as a Pallas TPU kernel."""
    ndim = x.ndim
    if ndim == 0:
        return x
    dim0 %= ndim
    dim1 %= ndim
    if dim0 == dim1:
        return x  # identity permutation: no HBM round trip

    a, b = sorted((dim0, dim1))
    shape = x.shape
    out_shape = list(shape)
    out_shape[a], out_shape[b] = out_shape[b], out_shape[a]
    out_shape = tuple(out_shape)

    if x.size == 0:
        return jnp.zeros(out_shape, x.dtype)
    if shape[a] == 1 or shape[b] == 1:
        # Swapping with a size-1 axis is a pure relabel -> free reshape.
        return jnp.reshape(x, out_shape)

    itemsize = jnp.dtype(x.dtype).itemsize
    sublane = {4: 8, 2: 16, 1: 32}.get(itemsize, 8)

    # ---- canonicalize: collapse untouched dim groups (free reshapes) -------
    # (L, A, M, B[, T]) -> (L, B, M, A[, T]); size-1 groups are dropped.
    L = math.prod(shape[:a]) if a > 0 else 1
    A = shape[a]
    M = math.prod(shape[a + 1:b]) if b > a + 1 else 1
    B = shape[b]
    T = math.prod(shape[b + 1:]) if b < ndim - 1 else 1
    has_T = T > 1

    canon, tags = [], []
    if L > 1:
        canon.append(L); tags.append("L")
    ca = len(canon); canon.append(A); tags.append("A")
    if M > 1:
        canon.append(M); tags.append("M")
    cb = len(canon); canon.append(B); tags.append("B")
    if has_T:
        canon.append(T); tags.append("T")
    rank = len(canon)
    canon = tuple(canon)
    canon_out = list(canon)
    canon_out[ca], canon_out[cb] = canon_out[cb], canon_out[ca]
    canon_out = tuple(canon_out)

    # ---- per-axis alignment / cap ------------------------------------------
    #   T            : lane axis on both sides            -> align 128, no cap
    #   A, B (has_T) : sublane axis on one side           -> align sublane, cap 512
    #   A, B (no T)  : lane axis on one side              -> align 128,    cap 512
    #   M    (has_T) : leading on both sides (batch)      -> align 1
    #   M    (no T)  : sublane axis on both sides         -> align sublane
    #   L            : leading batch                      -> align 1
    # "align" means: block extent must be a multiple of align OR the full dim.
    aligns, exts = [], []
    for d, t in zip(canon, tags):
        if t == "T":
            al, cap = 128, d
        elif t in ("A", "B"):
            al, cap = (sublane if has_T else 128), 512
        elif t == "M":
            al, cap = (1 if has_T else sublane), d
        else:  # "L"
            al, cap = 1, d
        aligns.append(al)
        exts.append(min(d, cap))
    exts = _fit_block(canon, exts, aligns, itemsize, block_bytes)

    grid_sizes = [pl.cdiv(canon[k], exts[k]) for k in range(rank)]

    # Keep >= 2 parallel blocks for sizeable arrays so v7x can use both TCs.
    if all(g == 1 for g in grid_sizes) and itemsize * math.prod(canon) >= (2 << 20):
        cand = [k for k in range(rank)
                if _shrink_once(canon[k], exts[k], aligns[k]) < exts[k]]
        if cand:
            k = min(cand, key=lambda i: (aligns[i], -exts[i]))
            exts[k] = _shrink_once(canon[k], exts[k], aligns[k])
            grid_sizes = [pl.cdiv(canon[kk], exts[kk]) for kk in range(rank)]

    in_block = tuple(exts)
    out_block = list(exts)
    out_block[ca], out_block[cb] = out_block[cb], out_block[ca]
    out_block = tuple(out_block)

    # ---- grid ordering: output-major so writebacks stream through HBM ------
    def out_pos(k):
        return cb if k == ca else ca if k == cb else k

    grid_order = sorted(range(rank), key=out_pos)   # last grid axis = fastest
    pos_in_grid = {k: i for i, k in enumerate(grid_order)}
    grid = tuple(grid_sizes[k] for k in grid_order)

    def in_map(*g):
        return tuple(g[pos_in_grid[k]] for k in range(rank))

    def out_map(*g):
        idx = [g[pos_in_grid[k]] for k in range(rank)]
        idx[ca], idx[cb] = idx[cb], idx[ca]
        return tuple(idx)

    # in + out blocks, double-buffered, plus relayout headroom; explicit so
    # the bigger tiles compile on v5e (16 MiB default scoped VMEM) and stay
    # well inside v7x's 64 MiB physical VMEM.
    vmem_limit = int(min(48 << 20, max(32 << 20, 6 * block_bytes)))

    x_canon = jnp.reshape(x, canon)                 # free (contiguous) reshape
    y_canon = pl.pallas_call(
        functools.partial(_swap_kernel, ca=ca, cb=cb),
        out_shape=jax.ShapeDtypeStruct(canon_out, x.dtype),
        grid_spec=pltpu.PrefetchScalarGridSpec(
            num_scalar_prefetch=0,
            grid=grid,
            in_specs=[pl.BlockSpec(in_block, in_map)],
            out_specs=pl.BlockSpec(out_block, out_map),
        ),
        compiler_params=pltpu.CompilerParams(
            # Every output block is written exactly once -> all axes parallel
            # (lets the v7x runtime shard the grid across its 2 TensorCores).
            dimension_semantics=("parallel",) * rank,
            vmem_limit_bytes=vmem_limit,
        ),
    )(x_canon)
    return jnp.reshape(y_canon, out_shape)          # free (contiguous) reshape


if __name__ == "__main__":
    key = jax.random.PRNGKey(0)
    # Small NCHW input consistent with the conv-stack the module sits in.
    x = jax.random.normal(key, (2, 4, 16, 16), dtype=jnp.float32)

    # Module instantiation from v5.py: Transpose(dim0=1, dim1=2) (C <-> H swap).
    out = jax.block_until_ready(transpose_pallas(x, 1, 2))
    ref = jnp.swapaxes(x, 1, 2)
    assert out.shape == ref.shape and out.dtype == ref.dtype
    assert bool(jnp.array_equal(out, ref)), "mismatch vs reference transpose(1,2)"

    # Leading-axis swap (exercises trailing-dim collapse -> lane-dense blocks).
    out2 = jax.block_until_ready(transpose_pallas(x, 0, 1))
    assert bool(jnp.array_equal(out2, jnp.swapaxes(x, 0, 1))), "mismatch transpose(0,1)"

    # Minor-dim (sublane <-> lane) swap.
    out3 = jax.block_until_ready(transpose_pallas(x, 2, 3))
    assert bool(jnp.array_equal(out3, jnp.swapaxes(x, 2, 3))), "mismatch transpose(2,3)"

    # dim0 == dim1 is a true no-op.
    out4 = transpose_pallas(x, 2, 2)
    assert bool(jnp.array_equal(out4, x))

    # Larger shape exercises multi-block tiling, grid ordering, forced split.
    y = jax.random.normal(jax.random.PRNGKey(1), (4, 8, 128, 256), dtype=jnp.float32)
    out5 = jax.block_until_ready(transpose_pallas(y, 1, 2))
    assert bool(jnp.array_equal(out5, jnp.swapaxes(y, 1, 2))), "mismatch large transpose(1,2)"

    print("KERNEL_OK")
</pallas_src>

<mosaic_0001>
module attributes {stable_mosaic.version = 11 : i64} {
  func.func @_swap_kernel(%arg0: i32, %arg1: i32, %arg2: i32, %arg3: i32, %arg4: memref<2x4x16x16xf32, #tpu.memory_space<vmem>>, %arg5: memref<2x16x4x16xf32, #tpu.memory_space<vmem>>) attributes {dimension_semantics = [#tpu.dimension_semantics<parallel>, #tpu.dimension_semantics<parallel>, #tpu.dimension_semantics<parallel>, #tpu.dimension_semantics<parallel>], iteration_bounds = array<i64: 1, 1, 1, 1>, scalar_prefetch = 0 : i64, scratch_operands = 0 : i64, tpu.core_type = #tpu.core_type<tc>, window_params = [{transform_indices = @transform_0, window_bounds = array<i64: 2, 4, 16, 16>}, {transform_indices = @transform_1, window_bounds = array<i64: 2, 16, 4, 16>}]} {
    %c0 = arith.constant 0 : index
    %c0_0 = arith.constant 0 : index
    %c0_1 = arith.constant 0 : index
    %c0_2 = arith.constant 0 : index
    %0 = vector.load %arg4[%c0, %c0_0, %c0_1, %c0_2] : memref<2x4x16x16xf32, #tpu.memory_space<vmem>>, vector<2x4x16x16xf32>
    %1 = tpu.transpose %0, [0, 2, 1, 3] : vector<2x4x16x16xf32> -> vector<2x16x4x16xf32>
    %c0_3 = arith.constant 0 : index
    %c0_4 = arith.constant 0 : index
    %c0_5 = arith.constant 0 : index
    %c0_6 = arith.constant 0 : index
    %2 = vector.load %arg5[%c0_3, %c0_4, %c0_5, %c0_6] : memref<2x16x4x16xf32, #tpu.memory_space<vmem>>, vector<2x16x4x16xf32>
    tpu.vector_store %arg5[%c0_3, %c0_4, %c0_5, %c0_6], %1 {strides = array<i32>} : memref<2x16x4x16xf32, #tpu.memory_space<vmem>>, vector<2x16x4x16xf32>,
    return
  }
  func.func @transform_0(%arg0: i32, %arg1: i32, %arg2: i32, %arg3: i32) -> (i32, i32, i32, i32) {
    %c0_i32 = arith.constant 0 : i32
    return %arg0, %arg2, %arg1, %arg3 : i32, i32, i32, i32
  }
  func.func @transform_1(%arg0: i32, %arg1: i32, %arg2: i32, %arg3: i32) -> (i32, i32, i32, i32) {
    %c0_i32 = arith.constant 0 : i32
    return %arg0, %arg1, %arg2, %arg3 : i32, i32, i32, i32
  }
}

</mosaic_0001>

<llo_original>
// kernel: tpu_custom_call.1
$region0: #{tpu_custom_call.1}
  #allocation0 [shape = 'u32[]', space=smem, size = 0x4, offset = 0x4, fixed_abs, tag = 'smem constant byte address 0x4 - core index']
  #allocation1 [shape = 'u32[72,128]{1,0:T(1,128)}', space=vmem, size = 0x9000, scoped, tag = 'internal scratch']
  %s0 = inlined_call_operand.hbm [shape: f32[2,4,16,16], index: 0, kind: input, shape index: {}]
  %s1 = inlined_call_operand.hbm [shape: f32[2,16,4,16], index: 1, kind: output, shape index: {}]
  %s2 = sld [smem:[#allocation0]]
  $region18: #{tpu_custom_call.1} parent=0
    _
  %s4 = ssub.s32 1, %s2
  %s5 = scalar_select 0, %s4, %s2
  $region1: #{tpu_custom_call.1} parent=0
    #allocation2 [shape = 'u8[65536]{0}', space=vmem, size = 0x10000, scoped, tag = 'input window, operand 0, single buffered']
    #allocation3 [shape = 's32[1]{0}', space=sflag, size = 0x4, scoped, tag = 'scoped memory for tpu_custom_call.1']
    #allocation4 [shape = 's32[1]{0}', space=sflag, size = 0x4, scoped, tag = 'scoped memory for tpu_custom_call.1']
    #allocation5 [shape = 'u8[65536]{0}', space=vmem, size = 0x10000, scoped, tag = 'output window, operand 0, single buffered']
    %6 = vsyncpa [#allocation3], 0
    %7 = vsyncpa [#allocation4], 0
    // Predicated region
    $region2: #{tpu_custom_call.1} parent=1 // pred_check
      _
    $region3: #{tpu_custom_call.1} parent=1 // pred_check_branch
      %9 = sbr.rel (0) target = $region5
    $region4: #{tpu_custom_call.1} parent=1 // pred_region
      %11 = vsyncadd [#allocation3], 0
      %s12 = sshll.u32 %s0, 4
      %s13 = int_to_ptr.hbm [resolvable:$true] %s12
      %s14 = sshll.u32 [#allocation2], 4
      %s15 = int_to_ptr.vmem [resolvable:$true] %s14
      %20 = dma.hbm_to_vmem [thread:$0]  %s13, 2048, %s15, [#allocation3], 128, 128, 8
    $region5: #{tpu_custom_call.1} parent=1 // pred_fallthru
      _
    // Predicated region
    $region6: #{tpu_custom_call.1} parent=1 // pred_check
      _
    $region7: #{tpu_custom_call.1} parent=1 // pred_check_branch
      %22 = sbr.rel (0) target = $region9
    $region8: #{tpu_custom_call.1} parent=1 // pred_region
      %24 = dma.done [#allocation3], 2048
    $region9: #{tpu_custom_call.1} parent=1 // pred_fallthru
      _
    %v25 = vld [vmem:[#allocation2] sm:$0xff]
    %v26 = vld [vmem:[#allocation2 + $0x8] sm:$0xff]
    %v27 = vld [vmem:[#allocation2 + $0x10] sm:$0xff]
    %v28 = vld [vmem:[#allocation2 + $0x18] sm:$0xff]
    %v29 = vld [vmem:[#allocation2 + $0x20] sm:$0xff]
    %v30 = vld [vmem:[#allocation2 + $0x28] sm:$0xff]
    %v31 = vld [vmem:[#allocation2 + $0x30] sm:$0xff]
    %v32 = vld [vmem:[#allocation2 + $0x38] sm:$0xff]
    %v33 = vld [vmem:[#allocation2 + $0x40] sm:$0xff]
    %v34 = vld [vmem:[#allocation2 + $0x48] sm:$0xff]
    %v35 = vld [vmem:[#allocation2 + $0x50] sm:$0xff]
    %v36 = vld [vmem:[#allocation2 + $0x58] sm:$0xff]
    %v37 = vld [vmem:[#allocation2 + $0x60] sm:$0xff]
    %v38 = vld [vmem:[#allocation2 + $0x68] sm:$0xff]
    %v39 = vld [vmem:[#allocation2 + $0x70] sm:$0xff]
    %v40 = vld [vmem:[#allocation2 + $0x78] sm:$0xff]
    %v41 = vrot.slane %v29, 4
    %vm42 = vcmask 1047556
    %v43 = vsel %vm42, %v41, %v25
    %v44 = vrot.slane %v25, 4
    %v45 = vsel %vm42, %v29, %v44
    %v47 = vunpack.c.l.s4 1983009808
    %v48 = vunpack.c.0.s8 %v47
    %v49 = vperm.slane %v43, %v48
    %v51 = vunpack.c.l.s4 1983009808
    %v52 = vunpack.c.0.s8 %v51
    %v53 = vperm.slane %v45, %v52
    %v54 = vrot.slane %v31, 4
    %v55 = vsel %vm42, %v54, %v27
    %v56 = vrot.slane %v27, 4
    %v57 = vsel %vm42, %v31, %v56
    %v59 = vunpack.c.l.s4 1983009808
    %v60 = vunpack.c.0.s8 %v59
    %v61 = vperm.slane %v55, %v60
    %v63 = vunpack.c.l.s4 1983009808
    %v64 = vunpack.c.0.s8 %v63
    %v65 = vperm.slane %v57, %v64
    %v66 = vrot.slane %v61, 4
    %v67 = vsel %vm42, %v66, %v49
    %v68 = vrot.slane %v49, 4
    %v69 = vsel %vm42, %v61, %v68
    %v71 = vunpack.c.l.s4 1934713408
    %v72 = vunpack.c.0.s8 %v71
    %v73 = vperm.slane %v67, %v72
    %v75 = vunpack.c.l.s4 1934713408
    %v76 = vunpack.c.0.s8 %v75
    %v77 = vperm.slane %v69, %v76
    %v78 = vrot.slane %v65, 4
    %v79 = vsel %vm42, %v78, %v53
    %v80 = vrot.slane %v53, 4
    %v81 = vsel %vm42, %v65, %v80
    %v83 = vunpack.c.l.s4 1934713408
    %v84 = vunpack.c.0.s8 %v83
    %v85 = vperm.slane %v79, %v84
    %v87 = vunpack.c.l.s4 1934713408
    %v88 = vunpack.c.0.s8 %v87
    %v89 = vperm.slane %v81, %v88
    %v90 = vrot.slane %v73, 4
    %v91 = vsel %vm42, 0.0, %v90
    %v92 = vrot.slane %v77, 4
    %v93 = vsel %vm42, 0.0, %v92
    %v94 = vrot.slane %v85, 4
    %v95 = vsel %vm42, 0.0, %v94
    %v96 = vrot.slane %v89, 4
    %v97 = vsel %vm42, 0.0, %v96
    %v98 = vrot.slane %v30, 4
    %v99 = vsel %vm42, %v98, %v26
    %v100 = vrot.slane %v26, 4
    %v101 = vsel %vm42, %v30, %v100
    %v103 = vunpack.c.l.s4 1983009808
    %v104 = vunpack.c.0.s8 %v103
    %v105 = vperm.slane %v99, %v104
    %v107 = vunpack.c.l.s4 1983009808
    %v108 = vunpack.c.0.s8 %v107
    %v109 = vperm.slane %v101, %v108
    %v110 = vrot.slane %v32, 4
    %v111 = vsel %vm42, %v110, %v28
    %v112 = vrot.slane %v28, 4
    %v113 = vsel %vm42, %v32, %v112
    %v115 = vunpack.c.l.s4 1983009808
    %v116 = vunpack.c.0.s8 %v115
    %v117 = vperm.slane %v111, %v116
    %v119 = vunpack.c.l.s4 1983009808
    %v120 = vunpack.c.0.s8 %v119
    %v121 = vperm.slane %v113, %v120
    %v122 = vrot.slane %v117, 4
    %v123 = vsel %vm42, %v122, %v105
    %v124 = vrot.slane %v105, 4
    %v125 = vsel %vm42, %v117, %v124
    %v127 = vunpack.c.l.s4 1934713408
    %v128 = vunpack.c.0.s8 %v127
    %v129 = vperm.slane %v123, %v128
    %v131 = vunpack.c.l.s4 1934713408
    %v132 = vunpack.c.0.s8 %v131
    %v133 = vperm.slane %v125, %v132
    %v134 = vrot.slane %v121, 4
    %v135 = vsel %vm42, %v134, %v109
    %v136 = vrot.slane %v109, 4
    %v137 = vsel %vm42, %v121, %v136
    %v139 = vunpack.c.l.s4 1934713408
    %v140 = vunpack.c.0.s8 %v139
    %v141 = vperm.slane %v135, %v140
    %v143 = vunpack.c.l.s4 1934713408
    %v144 = vunpack.c.0.s8 %v143
    %v145 = vperm.slane %v137, %v144
    %v146 = vrot.slane %v129, 4
    %v147 = vsel %vm42, 0.0, %v146
    %v148 = vrot.slane %v133, 4
    %v149 = vsel %vm42, 0.0, %v148
    %v150 = vrot.slane %v141, 4
    %v151 = vsel %vm42, 0.0, %v150
    %v152 = vrot.slane %v145, 4
    %v153 = vsel %vm42, 0.0, %v152
    %v154 = vrot.slane %v37, 4
    %v155 = vsel %vm42, %v154, %v33
    %v156 = vrot.slane %v33, 4
    %v157 = vsel %vm42, %v37, %v156
    %v159 = vunpack.c.l.s4 1983009808
    %v160 = vunpack.c.0.s8 %v159
    %v161 = vperm.slane %v155, %v160
    %v163 = vunpack.c.l.s4 1983009808
    %v164 = vunpack.c.0.s8 %v163
    %v165 = vperm.slane %v157, %v164
    %v166 = vrot.slane %v39, 4
    %v167 = vsel %vm42, %v166, %v35
    %v168 = vrot.slane %v35, 4
    %v169 = vsel %vm42, %v39, %v168
    %v171 = vunpack.c.l.s4 1983009808
    %v172 = vunpack.c.0.s8 %v171
    %v173 = vperm.slane %v167, %v172
    %v175 = vunpack.c.l.s4 1983009808
    %v176 = vunpack.c.0.s8 %v175
    %v177 = vperm.slane %v169, %v176
    %v178 = vrot.slane %v173, 4
    %v179 = vsel %vm42, %v178, %v161
    %v180 = vrot.slane %v161, 4
    %v181 = vsel %vm42, %v173, %v180
    %v183 = vunpack.c.l.s4 1934713408
    %v184 = vunpack.c.0.s8 %v183
    %v185 = vperm.slane %v179, %v184
    %v187 = vunpack.c.l.s4 1934713408
    %v188 = vunpack.c.0.s8 %v187
    %v189 = vperm.slane %v181, %v188
    %v190 = vrot.slane %v177, 4
    %v191 = vsel %vm42, %v190, %v165
    %v192 = vrot.slane %v165, 4
    %v193 = vsel %vm42, %v177, %v192
    %v195 = vunpack.c.l.s4 1934713408
    %v196 = vunpack.c.0.s8 %v195
    %v197 = vperm.slane %v191, %v196
    %v199 = vunpack.c.l.s4 1934713408
    %v200 = vunpack.c.0.s8 %v199
    %v201 = vperm.slane %v193, %v200
    %v202 = vrot.slane %v185, 4
    %v203 = vsel %vm42, 0.0, %v202
    %v204 = vrot.slane %v189, 4
    %v205 = vsel %vm42, 0.0, %v204
    %v206 = vrot.slane %v197, 4
    %v207 = vsel %vm42, 0.0, %v206
    %v208 = vrot.slane %v201, 4
    %v209 = vsel %vm42, 0.0, %v208
    %v210 = vrot.slane %v38, 4
    %v211 = vsel %vm42, %v210, %v34
    %v212 = vrot.slane %v34, 4
    %v213 = vsel %vm42, %v38, %v212
    %v215 = vunpack.c.l.s4 1983009808
    %v216 = vunpack.c.0.s8 %v215
    %v217 = vperm.slane %v211, %v216
    %v219 = vunpack.c.l.s4 1983009808
    %v220 = vunpack.c.0.s8 %v219
    %v221 = vperm.slane %v213, %v220
    %v222 = vrot.slane %v40, 4
    %v223 = vsel %vm42, %v222, %v36
    %v224 = vrot.slane %v36, 4
    %v225 = vsel %vm42, %v40, %v224
    %v227 = vunpack.c.l.s4 1983009808
    %v228 = vunpack.c.0.s8 %v227
    %v229 = vperm.slane %v223, %v228
    %v231 = vunpack.c.l.s4 1983009808
    %v232 = vunpack.c.0.s8 %v231
    %v233 = vperm.slane %v225, %v232
    %v234 = vrot.slane %v229, 4
    %v235 = vsel %vm42, %v234, %v217
    %v236 = vrot.slane %v217, 4
    %v237 = vsel %vm42, %v229, %v236
    %v239 = vunpack.c.l.s4 1934713408
    %v240 = vunpack.c.0.s8 %v239
    %v241 = vperm.slane %v235, %v240
    %v243 = vunpack.c.l.s4 1934713408
    %v244 = vunpack.c.0.s8 %v243
    %v245 = vperm.slane %v237, %v244
    %v246 = vrot.slane %v233, 4
    %v247 = vsel %vm42, %v246, %v221
    %v248 = vrot.slane %v221, 4
    %v249 = vsel %vm42, %v233, %v248
    %v251 = vunpack.c.l.s4 1934713408
    %v252 = vunpack.c.0.s8 %v251
    %v253 = vperm.slane %v247, %v252
    %v255 = vunpack.c.l.s4 1934713408
    %v256 = vunpack.c.0.s8 %v255
    %v257 = vperm.slane %v249, %v256
    %v258 = vrot.slane %v241, 4
    %v259 = vsel %vm42, 0.0, %v258
    %v260 = vrot.slane %v245, 4
    %v261 = vsel %vm42, 0.0, %v260
    %v262 = vrot.slane %v253, 4
    %v263 = vsel %vm42, 0.0, %v262
    %v264 = vrot.slane %v257, 4
    %v265 = vsel %vm42, 0.0, %v264
    %vm266 = vcmask 125952
    %267 = vst.msk [vmem:[#allocation5] sm:$0xf] %vm266, %v73
    %268 = vst.msk [vmem:[#allocation5 + $0x4] sm:$0xf] %vm266, %v91
    %269 = vst.msk [vmem:[#allocation5 + $0x8] sm:$0xf] %vm266, %v77
    %270 = vst.msk [vmem:[#allocation5 + $0xc] sm:$0xf] %vm266, %v93
    %271 = vst.msk [vmem:[#allocation5 + $0x10] sm:$0xf] %vm266, %v85
    %272 = vst.msk [vmem:[#allocation5 + $0x14] sm:$0xf] %vm266, %v95
    %273 = vst.msk [vmem:[#allocation5 + $0x18] sm:$0xf] %vm266, %v89
    %274 = vst.msk [vmem:[#allocation5 + $0x1c] sm:$0xf] %vm266, %v97
    %275 = vst.msk [vmem:[#allocation5 + $0x20] sm:$0xf] %vm266, %v129
    %276 = vst.msk [vmem:[#allocation5 + $0x24] sm:$0xf] %vm266, %v147
    %277 = vst.msk [vmem:[#allocation5 + $0x28] sm:$0xf] %vm266, %v133
    %278 = vst.msk [vmem:[#allocation5 + $0x2c] sm:$0xf] %vm266, %v149
    %279 = vst.msk [vmem:[#allocation5 + $0x30] sm:$0xf] %vm266, %v141
    %280 = vst.msk [vmem:[#allocation5 + $0x34] sm:$0xf] %vm266, %v151
    %281 = vst.msk [vmem:[#allocation5 + $0x38] sm:$0xf] %vm266, %v145
    %282 = vst.msk [vmem:[#allocation5 + $0x3c] sm:$0xf] %vm266, %v153
    %283 = vst.msk [vmem:[#allocation5 + $0x40] sm:$0xf] %vm266, %v185
    %284 = vst.msk [vmem:[#allocation5 + $0x44] sm:$0xf] %vm266, %v203
    %285 = vst.msk [vmem:[#allocation5 + $0x48] sm:$0xf] %vm266, %v189
    %286 = vst.msk [vmem:[#allocation5 + $0x4c] sm:$0xf] %vm266, %v205
    %287 = vst.msk [vmem:[#allocation5 + $0x50] sm:$0xf] %vm266, %v197
    %288 = vst.msk [vmem:[#allocation5 + $0x54] sm:$0xf] %vm266, %v207
    %289 = vst.msk [vmem:[#allocation5 + $0x58] sm:$0xf] %vm266, %v201
    %290 = vst.msk [vmem:[#allocation5 + $0x5c] sm:$0xf] %vm266, %v209
    %291 = vst.msk [vmem:[#allocation5 + $0x60] sm:$0xf] %vm266, %v241
    %292 = vst.msk [vmem:[#allocation5 + $0x64] sm:$0xf] %vm266, %v259
    %293 = vst.msk [vmem:[#allocation5 + $0x68] sm:$0xf] %vm266, %v245
    %294 = vst.msk [vmem:[#allocation5 + $0x6c] sm:$0xf] %vm266, %v261
    %295 = vst.msk [vmem:[#allocation5 + $0x70] sm:$0xf] %vm266, %v253
    %296 = vst.msk [vmem:[#allocation5 + $0x74] sm:$0xf] %vm266, %v263
    %297 = vst.msk [vmem:[#allocation5 + $0x78] sm:$0xf] %vm266, %v257
    %298 = vst.msk [vmem:[#allocation5 + $0x7c] sm:$0xf] %vm266, %v265
    // Predicated region
    $region10: #{tpu_custom_call.1} parent=1 // pred_check
      _
    $region11: #{tpu_custom_call.1} parent=1 // pred_check_branch
      %300 = sbr.rel (0) target = $region13
    $region12: #{tpu_custom_call.1} parent=1 // pred_region
      %302 = vsyncadd [#allocation4], 0
      %s303 = sshll.u32 [#allocation5], 4
      %s304 = int_to_ptr.vmem [resolvable:$true] %s303
      %s305 = sshll.u32 %s1, 4
      %s306 = int_to_ptr.hbm [resolvable:$true] %s305
      %311 = dma.vmem_to_hbm [thread:$0]  %s304, 2048, %s306, [#allocation4], 64, 64, 4
    $region13: #{tpu_custom_call.1} parent=1 // pred_fallthru
      _
    // Predicated region
    $region14: #{tpu_custom_call.1} parent=1 // pred_check
      _
    $region15: #{tpu_custom_call.1} parent=1 // pred_check_branch
      %313 = sbr.rel (0) target = $region17
    $region16: #{tpu_custom_call.1} parent=1 // pred_region
      %315 = dma.done [#allocation4], 2048
    $region17: #{tpu_custom_call.1} parent=1 // pred_fallthru
      _
    %316 = vsyncpa [#allocation3], 1
    %317 = vsyncpa [#allocation4], 1

</llo_original>
